<compile_context>
chip_gen: v6e
topology: v6e:2x2x1
jax: 0.10.0
libtpu: 0.0.40
codegen_flags: <defaults>
</compile_context>

<pallas_src>
import jax
import jax.numpy as jnp
from jax.experimental import pallas as pl
from jax.experimental.pallas import tpu as pltpu


# ---------------------------------------------------------------------------
# Fused kernel: both transposed convs + both ReLUs for one pixel tile.
# Layout is "transposed" (channels on sublanes, pixels on lanes).
# ---------------------------------------------------------------------------
def _decoder_kernel(x_ref, w1_ref, b1_ref, w2_ref, b2_ref, o_ref):
    # x_ref : (1, Cin, TM)      f32   (lane dim = pixels, dense)
    # w1_ref: (4*C1, Cin)       bf16  rows ordered (dy1, dx1, c1)
    # b1_ref: (4*C1, 1)         f32
    # w2_ref: (16*C2, 4*C1)     bf16  block-diagonal folded layer-2 weight
    # b2_ref: (16*C2, 1)        f32
    # o_ref : (1, 16*C2, TM)    f32   rows ordered (dy1, dx1, dy2, dx2, c2)
    x = x_ref[0].astype(jnp.bfloat16)                                    # (Cin, TM)

    # layer 1: one MXU matmul + bias + ReLU (f32 accumulate / elementwise)
    h1 = jnp.dot(w1_ref[...], x, preferred_element_type=jnp.float32)     # (4*C1, TM)
    h1 = jnp.maximum(h1 + b1_ref[...], 0.0)

    # layer 2: single block-diagonal MXU matmul + bias + ReLU
    h2 = jnp.dot(w2_ref[...], h1.astype(jnp.bfloat16),
                 preferred_element_type=jnp.float32)                     # (16*C2, TM)
    o_ref[0] = jnp.maximum(h2 + b2_ref[...], 0.0).astype(o_ref.dtype)


def _pick_pixel_tile(m, bytes_per_pixel, budget=4 << 20):
    """Largest lane-dense power-of-two tile that divides M and fits the budget."""
    if m % 128 != 0:
        return m                       # tiny / odd spatial sizes: full-extent block
    tile = 128
    while (tile * 2 <= m and m % (tile * 2) == 0
           and tile * 2 * bytes_per_pixel <= budget):
        tile *= 2
    return tile


# ---------------------------------------------------------------------------
# Wrapper: weight folding + one pallas_call + final output pixel-shuffle.
# Input / output are NCHW like the PyTorch module.
# ---------------------------------------------------------------------------
def decoder_forward(x_nchw, params):
    w1, b1 = params["w1"], params["b1"]      # (Cin, C1, 2, 2), (C1,)  [ConvTranspose2d]
    w2, b2 = params["w2"], params["b2"]      # (C1, C2, 2, 2), (C2,)
    N, Cin, H, W = x_nchw.shape
    C1, C2 = w1.shape[1], w2.shape[1]
    M = H * W

    # per-pixel HBM footprint (f32 in + f32 packed out) -> VMEM-aware tile choice
    TM = _pick_pixel_tile(M, (Cin + 16 * C2) * 4)

    # --- fold weights once (tiny XLA ops on (<=64 x 64) tensors) ------------
    # layer 1: rows (dy1, dx1, c1) x cols ci
    w1t = jnp.transpose(w1, (2, 3, 1, 0)).reshape(4 * C1, Cin)
    b1t = jnp.tile(b1, 4).reshape(4 * C1, 1)
    # layer 2 small matrix: rows (dy2, dx2, c2) x cols c1; replicated block-diagonally
    # over the 4 layer-1 sub-positions so layer 2 is ONE matmul.
    w2t = jnp.transpose(w2, (2, 3, 1, 0)).reshape(4 * C2, C1)
    w2blk = jnp.kron(jnp.eye(4, dtype=w2t.dtype), w2t)                  # (16*C2, 4*C1)
    b2t = jnp.tile(b2, 16).reshape(16 * C2, 1)

    # NCHW is already (N, C, H*W)-contiguous: this reshape moves no data.
    x3 = x_nchw.reshape(N, Cin, M)

    out = pl.pallas_call(
        _decoder_kernel,
        out_shape=jax.ShapeDtypeStruct((N, 16 * C2, M), jnp.float32),
        grid=(N, M // TM),
        in_specs=[
            pl.BlockSpec((1, Cin, TM), lambda n, m: (n, 0, m)),          # activations
            pl.BlockSpec((4 * C1, Cin), lambda n, m: (0, 0)),            # resident weights
            pl.BlockSpec((4 * C1, 1), lambda n, m: (0, 0)),
            pl.BlockSpec((16 * C2, 4 * C1), lambda n, m: (0, 0)),
            pl.BlockSpec((16 * C2, 1), lambda n, m: (0, 0)),
        ],
        out_specs=pl.BlockSpec((1, 16 * C2, TM), lambda n, m: (n, 0, m)),
        compiler_params=pltpu.CompilerParams(
            dimension_semantics=("parallel", "parallel")),
    )(x3,
      w1t.astype(jnp.bfloat16), b1t.astype(jnp.float32),
      w2blk.astype(jnp.bfloat16), b2t.astype(jnp.float32))

    # Scatter the per-pixel packed (dy1, dx1, dy2, dx2, c2) columns into the final
    # NCHW image.  This pure-relayout step is the only XLA data-movement op left
    # outside the kernel (it interleaves at stride-1 granularity in both output
    # spatial dims, which a rectangular BlockSpec cannot express).
    y = out.reshape(N, 2, 2, 2, 2, C2, H, W)                 # n,dy1,dx1,dy2,dx2,c2,h,w
    y = jnp.transpose(y, (0, 5, 6, 1, 3, 7, 2, 4))           # n,c2,h,dy1,dy2,w,dx1,dx2
    return y.reshape(N, C2, 4 * H, 4 * W)


# ---------------------------------------------------------------------------
# Pure-JAX reference (direct definition of ConvTranspose2d(k=2, s=2, p=0)).
# ---------------------------------------------------------------------------
def _conv_transpose_2x2_s2_ref(x, w, b):
    # x: (N, Ci, H, W); w: (Ci, Co, 2, 2); b: (Co,)
    y = jnp.einsum("nihw,ioyx->nohywx", x, w)                # (N, Co, H, 2, W, 2)
    N, Co, H, _, W, _ = y.shape
    return y.reshape(N, Co, 2 * H, 2 * W) + b.reshape(1, Co, 1, 1)


def decoder_reference(x, p):
    h = jax.nn.relu(_conv_transpose_2x2_s2_ref(x, p["w1"], p["b1"]))
    return jax.nn.relu(_conv_transpose_2x2_s2_ref(h, p["w2"], p["b2"]))


# ---------------------------------------------------------------------------
# Deterministic parameters (shapes from the module's __init__).
# ---------------------------------------------------------------------------
def init_params(key):
    k = jax.random.split(key, 4)
    return {
        "w1": 0.1 * jax.random.normal(k[0], (4, 16, 2, 2), jnp.float32),
        "b1": 0.05 * jax.random.normal(k[1], (16,), jnp.float32),
        "w2": 0.1 * jax.random.normal(k[2], (16, 1, 2, 2), jnp.float32),
        "b2": 0.05 * jax.random.normal(k[3], (1,), jnp.float32),
    }


if __name__ == "__main__":
    key = jax.random.PRNGKey(0)
    kx, kp = jax.random.split(key)

    N, Cin, H, W = 2, 4, 16, 16
    x = jax.random.normal(kx, (N, Cin, H, W), jnp.float32)   # NCHW like PyTorch
    params = init_params(kp)

    fwd = jax.jit(decoder_forward)
    out = jax.block_until_ready(fwd(x, params))
    ref = jax.block_until_ready(decoder_reference(x, params))

    assert out.shape == (N, 1, 4 * H, 4 * W), out.shape
    # bf16 matmul operands (f32 accumulate) -> loosened tolerance vs the f32 reference.
    assert jnp.allclose(out, ref, atol=5e-2, rtol=5e-2), float(jnp.max(jnp.abs(out - ref)))

    print("KERNEL_OK")
</pallas_src>

<mosaic_0001>
module attributes {stable_mosaic.version = 11 : i64} {
  func.func @_decoder_kernel(%arg0: i32, %arg1: i32, %arg2: memref<1x4x256xf32, #tpu.memory_space<vmem>>, %arg3: memref<64x4xbf16, #tpu.memory_space<vmem>>, %arg4: memref<64x1xf32, #tpu.memory_space<vmem>>, %arg5: memref<16x64xbf16, #tpu.memory_space<vmem>>, %arg6: memref<16x1xf32, #tpu.memory_space<vmem>>, %arg7: memref<1x16x256xf32, #tpu.memory_space<vmem>>) attributes {dimension_semantics = [#tpu.dimension_semantics<parallel>, #tpu.dimension_semantics<parallel>], iteration_bounds = array<i64: 2, 1>, scalar_prefetch = 0 : i64, scratch_operands = 0 : i64, tpu.core_type = #tpu.core_type<tc>, window_params = [{transform_indices = @transform_0, window_bounds = array<i64: 1, 4, 256>}, {pipeline_mode = #tpu.pipeline_mode<synchronous>, transform_indices = @transform_1, window_bounds = array<i64: 64, 4>}, {pipeline_mode = #tpu.pipeline_mode<synchronous>, transform_indices = @transform_2, window_bounds = array<i64: 64, 1>}, {pipeline_mode = #tpu.pipeline_mode<synchronous>, transform_indices = @transform_3, window_bounds = array<i64: 16, 64>}, {pipeline_mode = #tpu.pipeline_mode<synchronous>, transform_indices = @transform_4, window_bounds = array<i64: 16, 1>}, {transform_indices = @transform_5, window_bounds = array<i64: 1, 16, 256>}]} {
    %c0 = arith.constant 0 : index
    %c0_0 = arith.constant 0 : index
    %c0_1 = arith.constant 0 : index
    %0 = vector.load %arg2[%c0, %c0_0, %c0_1] : memref<1x4x256xf32, #tpu.memory_space<vmem>>, vector<1x4x256xf32>
    %1 = vector.shape_cast %0 : vector<1x4x256xf32> to vector<4x256xf32>
    %2 = arith.truncf %1 : vector<4x256xf32> to vector<4x256xbf16>
    %c0_2 = arith.constant 0 : index
    %c0_3 = arith.constant 0 : index
    %3 = vector.load %arg3[%c0_2, %c0_3] : memref<64x4xbf16, #tpu.memory_space<vmem>>, vector<64x4xbf16>
    %cst = arith.constant dense<0.000000e+00> : vector<64x256xf32>
    %4 = tpu.matmul %3, %2, %cst {dimension_numbers = #tpu.dot_dimension_numbers<[1], [0], [0], [1], [0, 0, 1, 1], [], []>} : vector<64x4xbf16>, vector<4x256xbf16>, vector<64x256xf32> -> vector<64x256xf32>
    %c0_4 = arith.constant 0 : index
    %c0_5 = arith.constant 0 : index
    %5 = vector.load %arg4[%c0_4, %c0_5] : memref<64x1xf32, #tpu.memory_space<vmem>>, vector<64x1xf32>
    %6 = vector.broadcast %5 : vector<64x1xf32> to vector<64x256xf32>
    %7 = arith.addf %4, %6 : vector<64x256xf32>
    %cst_6 = arith.constant 0.000000e+00 : f32
    %8 = vector.broadcast %cst_6 : f32 to vector<64x256xf32>
    %9 = arith.maximumf %7, %8 : vector<64x256xf32>
    %c0_7 = arith.constant 0 : index
    %c0_8 = arith.constant 0 : index
    %10 = vector.load %arg5[%c0_7, %c0_8] : memref<16x64xbf16, #tpu.memory_space<vmem>>, vector<16x64xbf16>
    %11 = arith.truncf %9 : vector<64x256xf32> to vector<64x256xbf16>
    %cst_9 = arith.constant dense<0.000000e+00> : vector<16x256xf32>
    %12 = tpu.matmul %10, %11, %cst_9 {dimension_numbers = #tpu.dot_dimension_numbers<[1], [0], [0], [1], [0, 0, 1, 1], [], []>} : vector<16x64xbf16>, vector<64x256xbf16>, vector<16x256xf32> -> vector<16x256xf32>
    %c0_10 = arith.constant 0 : index
    %c0_11 = arith.constant 0 : index
    %13 = vector.load %arg6[%c0_10, %c0_11] : memref<16x1xf32, #tpu.memory_space<vmem>>, vector<16x1xf32>
    %14 = vector.broadcast %13 : vector<16x1xf32> to vector<16x256xf32>
    %15 = arith.addf %12, %14 : vector<16x256xf32>
    %cst_12 = arith.constant 0.000000e+00 : f32
    %16 = vector.broadcast %cst_12 : f32 to vector<16x256xf32>
    %17 = arith.maximumf %15, %16 : vector<16x256xf32>
    %c0_13 = arith.constant 0 : index
    %c0_14 = arith.constant 0 : index
    %c0_15 = arith.constant 0 : index
    %18 = vector.load %arg7[%c0_13, %c0_14, %c0_15] : memref<1x16x256xf32, #tpu.memory_space<vmem>>, vector<1x16x256xf32>
    %19 = vector.shape_cast %18 : vector<1x16x256xf32> to vector<16x256xf32>
    %20 = vector.shape_cast %17 : vector<16x256xf32> to vector<1x16x256xf32>
    tpu.vector_store %arg7[%c0_13, %c0_14, %c0_15], %20 {strides = array<i32>} : memref<1x16x256xf32, #tpu.memory_space<vmem>>, vector<1x16x256xf32>,
    return
  }
  func.func @transform_0(%arg0: i32, %arg1: i32) -> (i32, i32, i32) {
    %c0_i32 = arith.constant 0 : i32
    %c0_i32_0 = arith.constant 0 : i32
    return %arg0, %c0_i32, %arg1 : i32, i32, i32
  }
  func.func @transform_1(%arg0: i32, %arg1: i32) -> (i32, i32) {
    %c0_i32 = arith.constant 0 : i32
    %c0_i32_0 = arith.constant 0 : i32
    %c0_i32_1 = arith.constant 0 : i32
    return %c0_i32, %c0_i32_0 : i32, i32
  }
  func.func @transform_2(%arg0: i32, %arg1: i32) -> (i32, i32) {
    %c0_i32 = arith.constant 0 : i32
    %c0_i32_0 = arith.constant 0 : i32
    %c0_i32_1 = arith.constant 0 : i32
    return %c0_i32, %c0_i32_0 : i32, i32
  }
  func.func @transform_3(%arg0: i32, %arg1: i32) -> (i32, i32) {
    %c0_i32 = arith.constant 0 : i32
    %c0_i32_0 = arith.constant 0 : i32
    %c0_i32_1 = arith.constant 0 : i32
    return %c0_i32, %c0_i32_0 : i32, i32
  }
  func.func @transform_4(%arg0: i32, %arg1: i32) -> (i32, i32) {
    %c0_i32 = arith.constant 0 : i32
    %c0_i32_0 = arith.constant 0 : i32
    %c0_i32_1 = arith.constant 0 : i32
    return %c0_i32, %c0_i32_0 : i32, i32
  }
  func.func @transform_5(%arg0: i32, %arg1: i32) -> (i32, i32, i32) {
    %c0_i32 = arith.constant 0 : i32
    %c0_i32_0 = arith.constant 0 : i32
    return %arg0, %c0_i32, %arg1 : i32, i32, i32
  }
}

</mosaic_0001>

<llo_original>
// kernel: tile.12
$region0: #{tile.12}
  #allocation2 [shape = 's32[1]{0}', space=sflag, size = 0x4, scoped, tag = 'scoped memory for tile.12']
  %s0 = inlined_call_operand.hbm [shape: f32[16], index: 0, kind: input, shape index: {}]
  %s1 = inlined_call_operand.vmem [shape: f32[4,16], index: 1, kind: output, shape index: {}]
  $region1: #{tile.12} parent=0
    #allocation0 [shape = 'u8[512]{0}', space=vmem, size = 0x400, scoped, tag = 'operand span for operand 0']
    #allocation1 [shape = 's32[1]{0}', space=sflag, size = 0x4, scoped, tag = 'scoped memory for tile.12']
    %2 = vsyncpa [#allocation1], 0
    // Predicated region
    $region2: #{tile.12} parent=1 // pred_check
      _
    $region3: #{tile.12} parent=1 // pred_check_branch
      %4 = sbr.rel (0) target = $region5
    $region4: #{tile.12} parent=1 // pred_region
      %s6 = ssub.s32 16, 16
      %7 = vsyncadd [#allocation1], %s6
      %s9 = sshll.u32 [#allocation0], 4
      %s10 = int_to_ptr.vmem [resolvable:$true] %s9
      %12 = dma.hbm_to_vmem [thread:$0]  %s0, 16, %s10, [#allocation1]
    $region5: #{tile.12} parent=1 // pred_fallthru
      _
    // Predicated region
    $region6: #{tile.12} parent=1 // pred_check
      _
    $region7: #{tile.12} parent=1 // pred_check_branch
      %14 = sbr.rel (0) target = $region9
    $region8: #{tile.12} parent=1 // pred_region
      %15 = dma.done [#allocation1], 16
    $region9: #{tile.12} parent=1 // pred_fallthru
      _
    %v16 = vld [vmem:[#allocation0] ss:$0 sm:$0xff]
    %17 = vst [vmem:[%s1] sm:$0xf] %v16
    %18 = vsyncpa [#allocation1], 1

// kernel: tile.17
$region0: #{tile.17}
  #allocation0 [shape = 's32[1]{0}', space=sflag, size = 0x4, scoped, tag = 'scoped memory for tile.17']
  %s0 = inlined_call_operand.<no memory space> [shape: f32[], index: 0, kind: input, shape index: {}]
  %s1 = inlined_call_operand.vmem [shape: f32[16,1], index: 1, kind: output, shape index: {}]
  %v2 = vstv %s0
  %3 = vst [vmem:[%s1] sm:$0xff] %v2
  %s4 = scalar_lea.vmem %s1, 8
  %5 = vst [vmem:[%s4] sm:$0xff] %v2

// kernel: tile.0
$region0: #{tile.0}
  %s0 = inlined_call_operand.vmem [shape: f32[4,16], index: 0, kind: input, shape index: {}]
  %s1 = inlined_call_operand.vmem [shape: f32[64,1], index: 1, kind: output, shape index: {}]
  $region1: #{tile.0} parent=0
    #allocation0 [shape = 'u8[4096]{0}', space=vmem, size = 0x1000, scoped, tag = 'scoped mem for input reshape']
    %s3 = sshll.u32 1, 4
    %s4 = ssub.s32 %s3, 1
    %v5 = vld [vmem:[%s0] sm:%s4]
    %6 = vst [vmem:[#allocation0] sm:%s4] %v5
    %v7 = vld [vmem:[#allocation0] sm:$0xf]
    %vm8 = vcmask 7168
    %9 = vst.msk [vmem:[%s1] ss:$16 sm:$0x3] %vm8, %v7
    %10 = vst.msk [vmem:[%s1] ss:$16 sm:$0xc] %vm8, %v7
    %v11 = vld [vmem:[#allocation0] sm:$0xf]
    %12 = vrot.lane.b32.xlu0 %v11, 127
    %v13 = vpop.permute.xlu0 %12
    %vm14 = vcmask 7168
    %s15 = scalar_lea.vmem %s1, 1
    %16 = vst.msk [vmem:[%s15] ss:$16 sm:$0x3] %vm14, %v13
    %s17 = scalar_lea.vmem %s1, 1
    %18 = vst.msk [vmem:[%s17] ss:$16 sm:$0xc] %vm14, %v13
    %v19 = vld [vmem:[#allocation0] sm:$0xf]
    %20 = vrot.lane.b32.xlu0 %v19, 126
    %v21 = vpop.permute.xlu0 %20
    %vm22 = vcmask 7168
    %s23 = scalar_lea.vmem %s1, 2
    %24 = vst.msk [vmem:[%s23] ss:$16 sm:$0x3] %vm22, %v21
    %s25 = scalar_lea.vmem %s1, 2
    %26 = vst.msk [vmem:[%s25] ss:$16 sm:$0xc] %vm22, %v21
    %v27 = vld [vmem:[#allocation0] sm:$0xf]
    %28 = vrot.lane.b32.xlu0 %v27, 125
    %v29 = vpop.permute.xlu0 %28
    %vm30 = vcmask 7168
    %s31 = scalar_lea.vmem %s1, 3
    %32 = vst.msk [vmem:[%s31] ss:$16 sm:$0x3] %vm30, %v29
    %s33 = scalar_lea.vmem %s1, 3
    %34 = vst.msk [vmem:[%s33] ss:$16 sm:$0xc] %vm30, %v29
    %v35 = vld [vmem:[#allocation0] sm:$0xf]
    %36 = vrot.lane.b32.xlu0 %v35, 124
    %v37 = vpop.permute.xlu0 %36
    %vm38 = vcmask 7168
    %s39 = scalar_lea.vmem %s1, 4
    %40 = vst.msk [vmem:[%s39] ss:$16 sm:$0x3] %vm38, %v37
    %s41 = scalar_lea.vmem %s1, 4
    %42 = vst.msk [vmem:[%s41] ss:$16 sm:$0xc] %vm38, %v37
    %v43 = vld [vmem:[#allocation0] sm:$0xf]
    %44 = vrot.lane.b32.xlu0 %v43, 123
    %v45 = vpop.permute.xlu0 %44
    %vm46 = vcmask 7168
    %s47 = scalar_lea.vmem %s1, 5
    %48 = vst.msk [vmem:[%s47] ss:$16 sm:$0x3] %vm46, %v45
    %s49 = scalar_lea.vmem %s1, 5
    %50 = vst.msk [vmem:[%s49] ss:$16 sm:$0xc] %vm46, %v45
    %v51 = vld [vmem:[#allocation0] sm:$0xf]
    %52 = vrot.lane.b32.xlu0 %v51, 122
    %v53 = vpop.permute.xlu0 %52
    %vm54 = vcmask 7168
    %s55 = scalar_lea.vmem %s1, 6
    %56 = vst.msk [vmem:[%s55] ss:$16 sm:$0x3] %vm54, %v53
    %s57 = scalar_lea.vmem %s1, 6
    %58 = vst.msk [vmem:[%s57] ss:$16 sm:$0xc] %vm54, %v53
    %v59 = vld [vmem:[#allocation0] sm:$0xf]
    %60 = vrot.lane.b32.xlu0 %v59, 121
    %v61 = vpop.permute.xlu0 %60
    %vm62 = vcmask 7168
    %s63 = scalar_lea.vmem %s1, 7
    %64 = vst.msk [vmem:[%s63] ss:$16 sm:$0x3] %vm62, %v61
    %s65 = scalar_lea.vmem %s1, 7
    %66 = vst.msk [vmem:[%s65] ss:$16 sm:$0xc] %vm62, %v61
    %v67 = vld [vmem:[#allocation0] sm:$0xf]
    %68 = vrot.lane.b32.xlu0 %v67, 120
    %v69 = vpop.permute.xlu0 %68
    %vm70 = vcmask 7168
    %s71 = scalar_lea.vmem %s1, 8
    %72 = vst.msk [vmem:[%s71] ss:$16 sm:$0x3] %vm70, %v69
    %s73 = scalar_lea.vmem %s1, 8
    %74 = vst.msk [vmem:[%s73] ss:$16 sm:$0xc] %vm70, %v69
    %v75 = vld [vmem:[#allocation0] sm:$0xf]
    %76 = vrot.lane.b32.xlu0 %v75, 119
    %v77 = vpop.permute.xlu0 %76
    %vm78 = vcmask 7168
    %s79 = scalar_lea.vmem %s1, 9
    %80 = vst.msk [vmem:[%s79] ss:$16 sm:$0x3] %vm78, %v77
    %s81 = scalar_lea.vmem %s1, 9
    %82 = vst.msk [vmem:[%s81] ss:$16 sm:$0xc] %vm78, %v77
    %v83 = vld [vmem:[#allocation0] sm:$0xf]
    %84 = vrot.lane.b32.xlu0 %v83, 118
    %v85 = vpop.permute.xlu0 %84
    %vm86 = vcmask 7168
    %s87 = scalar_lea.vmem %s1, 10
    %88 = vst.msk [vmem:[%s87] ss:$16 sm:$0x3] %vm86, %v85
    %s89 = scalar_lea.vmem %s1, 10
    %90 = vst.msk [vmem:[%s89] ss:$16 sm:$0xc] %vm86, %v85
    %v91 = vld [vmem:[#allocation0] sm:$0xf]
    %92 = vrot.lane.b32.xlu0 %v91, 117
    %v93 = vpop.permute.xlu0 %92
    %vm94 = vcmask 7168
    %s95 = scalar_lea.vmem %s1, 11
    %96 = vst.msk [vmem:[%s95] ss:$16 sm:$0x3] %vm94, %v93
    %s97 = scalar_lea.vmem %s1, 11
    %98 = vst.msk [vmem:[%s97] ss:$16 sm:$0xc] %vm94, %v93
    %v99 = vld [vmem:[#allocation0] sm:$0xf]
    %100 = vrot.lane.b32.xlu0 %v99, 116
    %v101 = vpop.permute.xlu0 %100
    %vm102 = vcmask 7168
    %s103 = scalar_lea.vmem %s1, 12
    %104 = vst.msk [vmem:[%s103] ss:$16 sm:$0x3] %vm102, %v101
    %s105 = scalar_lea.vmem %s1, 12
    %106 = vst.msk [vmem:[%s105] ss:$16 sm:$0xc] %vm102, %v101
    %v107 = vld [vmem:[#allocation0] sm:$0xf]
    %108 = vrot.lane.b32.xlu0 %v107, 115
    %v109 = vpop.permute.xlu0 %108
    %vm110 = vcmask 7168
    %s111 = scalar_lea.vmem %s1, 13
    %112 = vst.msk [vmem:[%s111] ss:$16 sm:$0x3] %vm110, %v109
    %s113 = scalar_lea.vmem %s1, 13
    %114 = vst.msk [vmem:[%s113] ss:$16 sm:$0xc] %vm110, %v109
    %v115 = vld [vmem:[#allocation0] sm:$0xf]
    %116 = vrot.lane.b32.xlu0 %v115, 114
    %v117 = vpop.permute.xlu0 %116
    %vm118 = vcmask 7168
    %s119 = scalar_lea.vmem %s1, 14
    %120 = vst.msk [vmem:[%s119] ss:$16 sm:$0x3] %vm118, %v117
    %s121 = scalar_lea.vmem %s1, 14
    %122 = vst.msk [vmem:[%s121] ss:$16 sm:$0xc] %vm118, %v117
    %v123 = vld [vmem:[#allocation0] sm:$0xf]
    %124 = vrot.lane.b32.xlu0 %v123, 113
    %v125 = vpop.permute.xlu0 %124
    %vm126 = vcmask 7168
    %s127 = scalar_lea.vmem %s1, 15
    %128 = vst.msk [vmem:[%s127] ss:$16 sm:$0x3] %vm126, %v125
    %s129 = scalar_lea.vmem %s1, 15
    %130 = vst.msk [vmem:[%s129] ss:$16 sm:$0xc] %vm126, %v125

// kernel: decoder_forward.1
$region0: #{decoder_forward.1}
  #allocation0 [shape = 'u32[]', space=smem, size = 0x4, offset = 0x4, fixed_abs, tag = 'smem constant byte address 0x4 - core index']
  #allocation1 [shape = 'u32[144,128]{1,0:T(1,128)}', space=vmem, size = 0x12000, scoped, tag = 'internal scratch']
  %s0 = inlined_call_operand.vmem [shape: f32[2,4,256], index: 0, kind: input, shape index: {}]
  %s1 = inlined_call_operand.vmem [shape: bf16[64,4], index: 1, kind: input, shape index: {}]
  %s2 = inlined_call_operand.vmem [shape: f32[64,1], index: 2, kind: input, shape index: {}]
  %s3 = inlined_call_operand.vmem [shape: bf16[16,64], index: 3, kind: input, shape index: {}]
  %s4 = inlined_call_operand.vmem [shape: f32[16,1], index: 4, kind: input, shape index: {}]
  %s5 = inlined_call_operand.vmem [shape: f32[2,16,256], index: 5, kind: output, shape index: {}]
  %s6 = sld [smem:[#allocation0]]
  $region53: #{decoder_forward.1} parent=0
    _
  %s8 = ssub.s32 1, %s6
  %s9 = scalar_select 0, %s8, %s6
  loop: start=0, step=1, limit=4
  $region2: #{decoder_forward.1} parent=0 // loop_pre_header
    _
  $region3: #{decoder_forward.1} parent=0 // loop_header
    %s11 = sphi 0, %s15
    %p12 = scmp.ge.s32.totalorder %s11, 4
    %s18 = sphi 0, %s30
    %s19 = sphi 0, %s26
    %s20 = sphi 0, %s18
    %s21 = sphi 0, %s19
    %s22 = sphi 0, %s20
    %s23 = sphi 0, %s21
    %s35 = sphi 0, %s37
    %s38 = sphi 0, %s35
    %s39 = sphi 0, %s38
    %s55 = sphi 0, %s39
    %s59 = sphi 0, %s59
    %s61 = sphi 0, %s59
    %s62 = sphi 0, %s61
    %s76 = sphi 0, %s62
    %s80 = sphi 0, %s80
    %s82 = sphi 0, %s80
    %s83 = sphi 0, %s82
    %s97 = sphi 0, %s83
    %s101 = sphi 0, %s101
    %s103 = sphi 0, %s101
    %s104 = sphi 0, %s103
    %s118 = sphi 0, %s104
    %s122 = sphi 0, %s122
    %s124 = sphi 0, %s122
    %s125 = sphi 0, %s124
    %s139 = sphi 0, %s125
    %s147 = sphi 0, %s149
    %s150 = sphi 0, %s147
    %s151 = sphi 0, %s150
    %s167 = sphi 0, %s151
  $region4: #{decoder_forward.1} parent=0 // loop_header_branch
    %14 = sbr.rel (%p12) target = $region8
  $region5: #{decoder_forward.1} parent=0 // loop_body
    %s16 = ssub.s32 %s11, 1
    %s17 = ssub.s32 %s11, 2
    %s24 = sadd.s32 1, %s19
    %p25 = scmp.ge.s32.totalorder %s24, 1
    %s26 = scalar_select %p25, 0, %s24
    %s27 = sadd.s32 1, %s18
    %s28 = scalar_select %p25, %s27, %s18
    %p29 = scmp.ge.s32.totalorder %s28, 2
    %s30 = scalar_select %p29, 0, %s28
    %s31 = ssub.s32 %s18, %s30
    %s32 = ssub.s32 %s19, %s26
    %s33 = sor.u32 %s31, %s32
    %p34 = scmp.eq.s32.totalorder %s33, 0
    %s36 = sadd.s32 %s35, 1
    %s37 = scalar_select %p34, %s35, %s36
    %p40 = pneg %p34
    %p41 = scmp.eq.s32.totalorder %s11, 1
    %p42 = por %p40, %p41
    %p43 = scmp.ne.s32.totalorder %s35, %s38
    %p44 = scmp.eq.s32.totalorder %s11, 0
    %p45 = por %p43, %p44
    %p46 = scmp.ne.s32.totalorder %s35, %s38
    %p47 = scmp.eq.s32.totalorder %s16, 1
    %p48 = por %p46, %p47
    %p49 = scmp.ne.s32.totalorder %s38, %s39
    %p50 = scmp.eq.s32.totalorder %s16, 0
    %p51 = por %p49, %p50
    %p52 = scmp.ne.s32.totalorder %s38, %s39
    %p53 = scmp.eq.s32.totalorder %s17, 1
    %p54 = por %p52, %p53
    %p56 = scmp.ne.s32.totalorder %s39, %s55
    %p57 = scmp.eq.s32.totalorder %s17, 0
    %p58 = por %p56, %p57
    %s60 = sadd.s32 %s59, 1
    %p63 = scmp.eq.s32.totalorder %s11, 1
    %p64 = scmp.ne.s32.totalorder %s59, %s61
    %p65 = scmp.eq.s32.totalorder %s11, 0
    %p66 = por %p64, %p65
    %p67 = scmp.ne.s32.totalorder %s59, %s61
    %p68 = scmp.eq.s32.totalorder %s16, 1
    %p69 = por %p67, %p68
    %p70 = scmp.ne.s32.totalorder %s61, %s62
    %p71 = scmp.eq.s32.totalorder %s16, 0
    %p72 = por %p70, %p71
    %p73 = scmp.ne.s32.totalorder %s61, %s62
    %p74 = scmp.eq.s32.totalorder %s17, 1
    %p75 = por %p73, %p74
    %p77 = scmp.ne.s32.totalorder %s62, %s76
    %p78 = scmp.eq.s32.totalorder %s17, 0
    %p79 = por %p77, %p78
    %s81 = sadd.s32 %s80, 1
    %p84 = scmp.eq.s32.totalorder %s11, 1
    %p85 = scmp.ne.s32.totalorder %s80, %s82
    %p86 = scmp.eq.s32.totalorder %s11, 0
    %p87 = por %p85, %p86
    %p88 = scmp.ne.s32.totalorder %s80, %s82
    %p89 = scmp.eq.s32.totalorder %s16, 1
    %p90 = por %p88, %p89
    %p91 = scmp.ne.s32.totalorder %s82, %s83
    %p92 = scmp.eq.s32.totalorder %s16, 0
    %p93 = por %p91, %p92
    %p94 = scmp.ne.s32.totalorder %s82, %s83
    %p95 = scmp.eq.s32.totalorder %s17, 1
    %p96 = por %p94, %p95
    %p98 = scmp.ne.s32.totalorder %s83, %s97
    %p99 = scmp.eq.s32.totalorder %s17, 0
    %p100 = por %p98, %p99
    %s102 = sadd.s32 %s101, 1
    %p105 = scmp.eq.s32.totalorder %s11, 1
    %p106 = scmp.ne.s32.totalorder %s101, %s103
    %p107 = scmp.eq.s32.totalorder %s11, 0
    %p108 = por %p106, %p107
    %p109 = scmp.ne.s32.totalorder %s101, %s103
    %p110 = scmp.eq.s32.totalorder %s16, 1
    %p111 = por %p109, %p110
    %p112 = scmp.ne.s32.totalorder %s103, %s104
    %p113 = scmp.eq.s32.totalorder %s16, 0
    %p114 = por %p112, %p113
    %p115 = scmp.ne.s32.totalorder %s103, %s104
    %p116 = scmp.eq.s32.totalorder %s17, 1
    %p117 = por %p115, %p116
    %p119 = scmp.ne.s32.totalorder %s104, %s118
    %p120 = scmp.eq.s32.totalorder %s17, 0
    %p121 = por %p119, %p120
    %s123 = sadd.s32 %s122, 1
    %p126 = scmp.eq.s32.totalorder %s11, 1
    %p127 = scmp.ne.s32.totalorder %s122, %s124
    %p128 = scmp.eq.s32.totalorder %s11, 0
    %p129 = por %p127, %p128
    %p130 = scmp.ne.s32.totalorder %s122, %s124
    %p131 = scmp.eq.s32.totalorder %s16, 1
    %p132 = por %p130, %p131
    %p133 = scmp.ne.s32.totalorder %s124, %s125
    %p134 = scmp.eq.s32.totalorder %s16, 0
    %p135 = por %p133, %p134
    %p136 = scmp.ne.s32.totalorder %s124, %s125
    %p137 = scmp.eq.s32.totalorder %s17, 1
    %p138 = por %p136, %p137
    %p140 = scmp.ne.s32.totalorder %s125, %s139
    %p141 = scmp.eq.s32.totalorder %s17, 0
    %p142 = por %p140, %p141
    %s143 = ssub.s32 %s18, %s30
    %s144 = ssub.s32 %s19, %s26
    %s145 = sor.u32 %s143, %s144
    %p146 = scmp.eq.s32.totalorder %s145, 0
    %s148 = sadd.s32 %s147, 1
    %s149 = scalar_select %p146, %s147, %s148
    %p152 = pneg %p146
    %p153 = scmp.eq.s32.totalorder %s11, 1
    %p154 = por %p152, %p153
    %p155 = scmp.ne.s32.totalorder %s147, %s150
    %p156 = scmp.eq.s32.totalorder %s11, 0
    %p157 = por %p155, %p156
    %p158 = scmp.ne.s32.totalorder %s147, %s150
    %p159 = scmp.eq.s32.totalorder %s16, 1
    %p160 = por %p158, %p159
    %p161 = scmp.ne.s32.totalorder %s150, %s151
    %p162 = scmp.eq.s32.totalorder %s16, 0
    %p163 = por %p161, %p162
    %p164 = scmp.ne.s32.totalorder %s150, %s151
    %p165 = scmp.eq.s32.totalorder %s17, 1
    %p166 = por %p164, %p165
    %p168 = scmp.ne.s32.totalorder %s151, %s167
    %p169 = scmp.eq.s32.totalorder %s17, 0
    %p170 = por %p168, %p169
    %p171 = scmp.le.s32.totalorder 1, %s11
    %p172 = scmp.lt.s32.totalorder %s11, 3
    %p173 = pnand %p171, %p172
    %p174 = pneg %p173
    // Predicated region
    $region9: #{decoder_forward.1} parent=5 // pred_check
      _
    $region10: #{decoder_forward.1} parent=5 // pred_check_branch
      %176 = sbr.rel (%p173) target = $region12
    $region11: #{decoder_forward.1} parent=5 // pred_region
      %s177 = ssub.s32 %s11, 1
      // Predicated region
      $region13: #{decoder_forward.1} parent=11 // pred_check
        %p178 = pneg %p72
      $region14: #{decoder_forward.1} parent=11 // pred_check_branch
        %180 = sbr.rel (%p178) target = $region16
      $region15: #{decoder_forward.1} parent=11 // pred_region
        _
      $region16: #{decoder_forward.1} parent=11 // pred_fallthru
        _
      // Predicated region
      $region17: #{decoder_forward.1} parent=11 // pred_check
        %p181 = pneg %p93
      $region18: #{decoder_forward.1} parent=11 // pred_check_branch
        %183 = sbr.rel (%p181) target = $region20
      $region19: #{decoder_forward.1} parent=11 // pred_region
        _
      $region20: #{decoder_forward.1} parent=11 // pred_fallthru
        _
      // Predicated region
      $region21: #{decoder_forward.1} parent=11 // pred_check
        %p184 = pneg %p114
      $region22: #{decoder_forward.1} parent=11 // pred_check_branch
        %186 = sbr.rel (%p184) target = $region24
      $region23: #{decoder_forward.1} parent=11 // pred_region
        _
      $region24: #{decoder_forward.1} parent=11 // pred_fallthru
        _
      // Predicated region
      $region25: #{decoder_forward.1} parent=11 // pred_check
        %p187 = pneg %p135
      $region26: #{decoder_forward.1} parent=11 // pred_check_branch
        %189 = sbr.rel (%p187) target = $region28
      $region27: #{decoder_forward.1} parent=11 // pred_region
        _
      $region28: #{decoder_forward.1} parent=11 // pred_fallthru
        _
    $region12: #{decoder_forward.1} parent=5 // pred_fallthru
      _
    %p190 = scmp.lt.s32.totalorder %s11, 2
    // Predicated region
    $region29: #{decoder_forward.1} parent=5 // pred_check
      %p191 = pneg %p190
    $region30: #{decoder_forward.1} parent=5 // pred_check_branch
      %193 = sbr.rel (%p191) target = $region32
    $region31: #{decoder_forward.1} parent=5 // pred_region
      // Predicated region
      $region33: #{decoder_forward.1} parent=31 // pred_check
        %p194 = pneg %p45
      $region34: #{decoder_forward.1} parent=31 // pred_check_branch
        %196 = sbr.rel (%p194) target = $region36
      $region35: #{decoder_forward.1} parent=31 // pred_region
        %s197 = smul.u32 2, %s19
        %p198 = scmp.lt.s32.totalorder %s18, 1
        %s199 = scalar_select %p198, %s18, 1
        %p200 = scmp.lt.s32.totalorder %s197, 1
        %s201 = scalar_select %p200, %s197, 1
        %s202 = smul.addr %s199, 2
        %s203 = sadd.s32 %s201, %s202
        %s204 = smul.addr %s203, 4
        %s205 = scalar_lea.vmem %s0, %s204
        %s206 = smul.u32 2, %s19
      $region36: #{decoder_forward.1} parent=31 // pred_fallthru
        _
    $region32: #{decoder_forward.1} parent=5 // pred_fallthru
      _
    %p207 = scmp.le.s32.totalorder 1, %s11
    %p208 = scmp.lt.s32.totalorder %s11, 3
    %p209 = pnand %p207, %p208
    %p210 = pneg %p209
    // Predicated region
    $region37: #{decoder_forward.1} parent=5 // pred_check
      _
    $region38: #{decoder_forward.1} parent=5 // pred_check_branch
      %212 = sbr.rel (%p209) target = $region40
    $region39: #{decoder_forward.1} parent=5 // pred_region
      %s213 = ssub.s32 %s11, 1
      %s214 = smul.u32 2, %s21
      %p215 = scmp.lt.s32.totalorder %s20, 1
      %s216 = scalar_select %p215, %s20, 1
      %p217 = scmp.lt.s32.totalorder %s214, 1
      %s218 = scalar_select %p217, %s214, 1
      %s219 = smul.addr %s216, 2
      %s220 = sadd.s32 %s218, %s219
      %s221 = smul.addr %s220, 4
      %s222 = scalar_lea.vmem %s0, %s221
      %p223 = pneg %p51
      %p224 = pneg %p48
      %p225 = pneg %p72
      %p226 = pneg %p69
      %p227 = pneg %p93
      %p228 = pneg %p90
      %p229 = pneg %p114
      %p230 = pneg %p111
      %p231 = pneg %p135
      %p232 = pneg %p132
      %p233 = pneg %p163
      %p234 = pneg %p160
      %s235 = smul.u32 2, %s21
      %p236 = scmp.lt.s32.totalorder %s20, 1
      %s237 = scalar_select %p236, %s20, 1
      %p238 = scmp.lt.s32.totalorder %s235, 1
      %s239 = scalar_select %p238, %s235, 1
      %s240 = smul.addr %s237, 4
      %s241 = sadd.s32 %s239, %s240
      %s242 = smul.addr %s241, 8
      %s243 = scalar_lea.vmem %s5, %s242
      %s244 = smul.u32 2, %s21
      %p245 = scmp.lt.s32.totalorder %s20, 1
      %s246 = scalar_select %p245, %s20, 1
      %p247 = scmp.lt.s32.totalorder %s244, 1
      %s248 = scalar_select %p247, %s244, 1
      %s249 = smul.addr %s246, 2
      %s250 = sadd.s32 %s248, %s249
      %s251 = smul.addr %s250, 4
      %s252 = scalar_lea.vmem %s0, %s251
      %s253 = smul.u32 2, %s21
      %s254 = smul.u32 2, %s21
      %p255 = scmp.lt.s32.totalorder %s20, 1
      %s256 = scalar_select %p255, %s20, 1
      %p257 = scmp.lt.s32.totalorder %s254, 1
      %s258 = scalar_select %p257, %s254, 1
      %s259 = smul.addr %s256, 4
      %s260 = sadd.s32 %s258, %s259
      %s261 = smul.addr %s260, 8
      %s262 = scalar_lea.vmem %s5, %s261
      %s263 = smul.u32 2, %s21
      %v265 = vld [vmem:[%s252] sm:$0xff]
      %v267 = vcombine.high %v265, %v265
      %v269 = vpack.c.bf16 %v265, %v265
      %v270 = vpack.c.bf16 %v267, %v267
      %v271 = vld [vmem:[%s1] sm:$0xf]
      %v272 = vld [vmem:[%s1 + $0x4] sm:$0xf]
      %v273 = vld [vmem:[%s1 + $0x8] sm:$0xf]
      %v274 = vld [vmem:[%s1 + $0xc] sm:$0xf]
      %v275 = vld [vmem:[%s1 + $0x10] sm:$0xf]
      %v276 = vld [vmem:[%s1 + $0x14] sm:$0xf]
      %v277 = vld [vmem:[%s1 + $0x18] sm:$0xf]
      %v278 = vld [vmem:[%s1 + $0x1c] sm:$0xf]
      %v279 = vld [vmem:[%s2] sm:$0xff]
      %v280 = vld [vmem:[%s2 + $0x8] sm:$0xff]
      %v281 = vld [vmem:[%s2 + $0x10] sm:$0xff]
      %v282 = vld [vmem:[%s2 + $0x18] sm:$0xff]
      %v283 = vld [vmem:[%s2 + $0x20] sm:$0xff]
      %v284 = vld [vmem:[%s2 + $0x28] sm:$0xff]
      %v285 = vld [vmem:[%s2 + $0x30] sm:$0xff]
      %v286 = vld [vmem:[%s2 + $0x38] sm:$0xff]
      %288 = vset.pattern.permute.xlu0 0
      %289 = vperm.xlu0 %288, %v279
      %v290 = vpop.permute.xlu0 %289
      %293 = vset.pattern.permute.xlu0 0
      %294 = vperm.xlu0 %293, %v280
      %v295 = vpop.permute.xlu0 %294
      %298 = vset.pattern.permute.xlu0 0
      %299 = vperm.xlu0 %298, %v281
      %v300 = vpop.permute.xlu0 %299
      %303 = vset.pattern.permute.xlu0 0
      %304 = vperm.xlu0 %303, %v282
      %v305 = vpop.permute.xlu0 %304
      %308 = vset.pattern.permute.xlu0 0
      %309 = vperm.xlu0 %308, %v283
      %v310 = vpop.permute.xlu0 %309
      %313 = vset.pattern.permute.xlu0 0
      %314 = vperm.xlu0 %313, %v284
      %v315 = vpop.permute.xlu0 %314
      %318 = vset.pattern.permute.xlu0 0
      %319 = vperm.xlu0 %318, %v285
      %v320 = vpop.permute.xlu0 %319
      %323 = vset.pattern.permute.xlu0 0
      %324 = vperm.xlu0 %323, %v286
      %v325 = vpop.permute.xlu0 %324
      %v335 = vunpack.c.l.b16 %v271
      %v336 = vunpack.c.l.b16 %v272
      %v337 = vunpack.c.l.b16 %v273
      %v338 = vunpack.c.l.b16 %v274
      %v339 = vunpack.c.l.b16 %v275
      %v340 = vunpack.c.l.b16 %v276
      %v341 = vunpack.c.l.b16 %v277
      %v342 = vunpack.c.l.b16 %v278
      %v343 = vpack.c.b16 %v336, %v335
      %v344 = vpack.c.b16 %v338, %v337
      %v345 = vpack.c.b16 %v340, %v339
      %v346 = vpack.c.b16 %v342, %v341
      %vm347 = vcmask 31744
      %v349 = vsel %vm347, %v343, 0
      %v352 = vsel %vm347, %v344, 0
      %v355 = vsel %vm347, %v345, 0
      %v358 = vsel %vm347, %v346, 0
      %vm360 = vcmask 1041408
      %v362 = vsel %vm360, %v269, 0
      %v365 = vsel %vm360, %v270, 0
      %367 = vmatprep.subr.bf16.mxu0 0
      %368 = vmatpush1.bf16.msra.mxu0 0
      %369 = vmatprep.subr.bf16.mxu0 0
      %370 = vmatpush1.bf16.msra.mxu0 0
      %371 = vmatprep.subr.bf16.mxu0 0
      %372 = vmatpush1.bf16.msra.mxu0 0
      %373 = vmatprep.subr.bf16.mxu0 0
      %374 = vmatpush1.bf16.msra.mxu0 0
      %375 = vmatprep.subr.bf16.mxu0 0
      %376 = vmatpush1.bf16.msra.mxu0 0
      %377 = vmatprep.subr.bf16.mxu0 0
      %378 = vmatpush1.bf16.msra.mxu0 0
      %379 = vmatprep.subr.bf16.mxu0 0
      %380 = vmatpush1.bf16.msra.mxu0 0
      %381 = vmatprep.subr.bf16.mxu0 %v365
      %382 = vmatpush1.bf16.msra.mxu0 %v362
      %383 = vmatprep.subr.bf16.mxu0 0
      %384 = vmatpush2.bf16.msra.mxu0 0
      %385 = vmatprep.subr.bf16.mxu0 0
      %386 = vmatpush2.bf16.msra.mxu0 0
      %387 = vmatprep.subr.bf16.mxu0 0
      %388 = vmatpush2.bf16.msra.mxu0 0
      %389 = vmatprep.subr.bf16.mxu0 0
      %390 = vmatpush2.bf16.msra.mxu0 0
      %391 = vmatprep.subr.bf16.mxu0 0
      %392 = vmatpush2.bf16.msra.mxu0 0
      %393 = vmatprep.subr.bf16.mxu0 0
      %394 = vmatpush2.bf16.msra.mxu0 0
      %395 = vmatprep.subr.bf16.mxu0 0
      %396 = vmatpush2.bf16.msra.mxu0 0
      %397 = vmatprep.subr.bf16.mxu0 0
      %398 = vmatpush2.bf16.msra.mxu0 0
      %399 = vmatprep.mubr.bf16.mxu0 0
      %400 = vmatmul.mubr.bf16.gmra.mxu0 %v349
      %v401 = vpop.f32.mrf.mxu0
      %v402 = vadd.f32 %v290, %v401
      %v403 = vpop.f32.mrf.mxu0
      %v404 = vadd.f32 %v290, %v403
      %v405 = vpop.f32.mrf.mxu0
      %v406 = vadd.f32 %v295, %v405
      %v407 = vpop.f32.mrf.mxu0
      %v408 = vadd.f32 %v295, %v407
      %409 = vmatprep.mubr.bf16.mxu0 0
      %410 = vmatmul.mubr.bf16.gmra.mxu0 %v352
      %v411 = vpop.f32.mrf.mxu0
      %v412 = vadd.f32 %v300, %v411
      %v413 = vpop.f32.mrf.mxu0
      %v414 = vadd.f32 %v300, %v413
      %v415 = vpop.f32.mrf.mxu0
      %v416 = vadd.f32 %v305, %v415
      %v417 = vpop.f32.mrf.mxu0
      %v418 = vadd.f32 %v305, %v417
      %419 = vmatprep.mubr.bf16.mxu0 0
      %420 = vmatmul.mubr.bf16.gmra.mxu0 %v355
      %v421 = vpop.f32.mrf.mxu0
      %v422 = vadd.f32 %v310, %v421
      %v423 = vpop.f32.mrf.mxu0
      %v424 = vadd.f32 %v310, %v423
      %v425 = vpop.f32.mrf.mxu0
      %v426 = vadd.f32 %v315, %v425
      %v427 = vpop.f32.mrf.mxu0
      %v428 = vadd.f32 %v315, %v427
      %429 = vmatprep.mubr.bf16.mxu0 0
      %430 = vmatmul.mubr.bf16.gmra.mxu0 %v358
      %v431 = vpop.f32.mrf.mxu0
      %v432 = vadd.f32 %v320, %v431
      %v433 = vpop.f32.mrf.mxu0
      %v434 = vadd.f32 %v320, %v433
      %v435 = vpop.f32.mrf.mxu0
      %v436 = vadd.f32 %v325, %v435
      %v437 = vpop.f32.mrf.mxu0
      %v438 = vadd.f32 %v325, %v437
      %439 = vdwg.mxu0
      %v440 = vmax.f32 %v402, 0.0
      %v441 = vmax.f32 %v404, 0.0
      %v442 = vmax.f32 %v406, 0.0
      %v443 = vmax.f32 %v408, 0.0
      %v444 = vmax.f32 %v412, 0.0
      %v445 = vmax.f32 %v414, 0.0
      %v446 = vmax.f32 %v416, 0.0
      %v447 = vmax.f32 %v418, 0.0
      %v448 = vmax.f32 %v422, 0.0
      %v449 = vmax.f32 %v424, 0.0
      %v450 = vmax.f32 %v426, 0.0
      %v451 = vmax.f32 %v428, 0.0
      %v452 = vmax.f32 %v432, 0.0
      %v453 = vmax.f32 %v434, 0.0
      %v454 = vmax.f32 %v436, 0.0
      %v455 = vmax.f32 %v438, 0.0
      %v456 = vld [vmem:[%s3] sm:$0xf]
      %v457 = vld [vmem:[%s3 + $0x4] sm:$0xf]
      %v458 = vpack.c.bf16 %v442, %v440
      %v459 = vpack.c.bf16 %v443, %v441
      %v460 = vpack.c.bf16 %v446, %v444
      %v461 = vpack.c.bf16 %v447, %v445
      %v462 = vpack.c.bf16 %v450, %v448
      %v463 = vpack.c.bf16 %v451, %v449
      %v464 = vpack.c.bf16 %v454, %v452
      %v465 = vpack.c.bf16 %v455, %v453
      %v466 = vld [vmem:[%s4] sm:$0xff]
      %v467 = vld [vmem:[%s4 + $0x8] sm:$0xff]
      %469 = vset.pattern.permute.xlu0 0
      %470 = vperm.xlu0 %469, %v466
      %v471 = vpop.permute.xlu0 %470
      %474 = vset.pattern.permute.xlu0 0
      %475 = vperm.xlu0 %474, %v467
      %v476 = vpop.permute.xlu0 %475
      %v480 = vunpack.c.l.b16 %v456
      %v481 = vunpack.c.l.b16 %v457
      %v482 = vpack.c.b16 %v481, %v480
      %vm483 = vcmask 523264
      %v485 = vsel %vm483, %v482, 0
      %487 = vmatprep.subr.bf16.mxu0 0
      %488 = vmatpush1.bf16.msra.mxu0 0
      %489 = vmatprep.subr.bf16.mxu0 0
      %490 = vmatpush1.bf16.msra.mxu0 0
      %491 = vmatprep.subr.bf16.mxu0 0
      %492 = vmatpush1.bf16.msra.mxu0 0
      %493 = vmatprep.subr.bf16.mxu0 0
      %494 = vmatpush1.bf16.msra.mxu0 0
      %495 = vmatprep.subr.bf16.mxu0 %v465
      %496 = vmatpush1.bf16.msra.mxu0 %v464
      %497 = vmatprep.subr.bf16.mxu0 %v463
      %498 = vmatpush1.bf16.msra.mxu0 %v462
      %499 = vmatprep.subr.bf16.mxu0 %v461
      %500 = vmatpush1.bf16.msra.mxu0 %v460
      %501 = vmatprep.subr.bf16.mxu0 %v459
      %502 = vmatpush1.bf16.msra.mxu0 %v458
      %503 = vmatprep.subr.bf16.mxu0 0
      %504 = vmatpush2.bf16.msra.mxu0 0
      %505 = vmatprep.subr.bf16.mxu0 0
      %506 = vmatpush2.bf16.msra.mxu0 0
      %507 = vmatprep.subr.bf16.mxu0 0
      %508 = vmatpush2.bf16.msra.mxu0 0
      %509 = vmatprep.subr.bf16.mxu0 0
      %510 = vmatpush2.bf16.msra.mxu0 0
      %511 = vmatprep.subr.bf16.mxu0 0
      %512 = vmatpush2.bf16.msra.mxu0 0
      %513 = vmatprep.subr.bf16.mxu0 0
      %514 = vmatpush2.bf16.msra.mxu0 0
      %515 = vmatprep.subr.bf16.mxu0 0
      %516 = vmatpush2.bf16.msra.mxu0 0
      %517 = vmatprep.subr.bf16.mxu0 0
      %518 = vmatpush2.bf16.msra.mxu0 0
      %519 = vmatprep.mubr.bf16.mxu0 0
      %520 = vmatmul.mubr.bf16.gmra.mxu0 %v485
      %v521 = vpop.f32.mrf.mxu0
      %v522 = vadd.f32 %v471, %v521
      %v523 = vpop.f32.mrf.mxu0
      %v524 = vadd.f32 %v471, %v523
      %v525 = vpop.f32.mrf.mxu0
      %v526 = vadd.f32 %v476, %v525
      %v527 = vpop.f32.mrf.mxu0
      %v528 = vadd.f32 %v476, %v527
      %529 = vdwg.mxu0
      %v530 = vmax.f32 %v522, 0.0
      %v531 = vmax.f32 %v524, 0.0
      %v532 = vmax.f32 %v526, 0.0
      %v533 = vmax.f32 %v528, 0.0
      %534 = vst [vmem:[%s262] sm:$0xff] %v530
      %535 = vst [vmem:[%s262 + $0x8] sm:$0xff] %v531
      %536 = vst [vmem:[%s262 + $0x10] sm:$0xff] %v532
      %537 = vst [vmem:[%s262 + $0x18] sm:$0xff] %v533
      %s538 = smul.u32 2, %s21
      %p539 = scmp.lt.s32.totalorder %s20, 1
      %s540 = scalar_select %p539, %s20, 1
      %p541 = scmp.lt.s32.totalorder %s538, 1
      %s542 = scalar_select %p541, %s538, 1
      %s543 = smul.addr %s540, 4
      %s544 = sadd.s32 %s542, %s543
      %s545 = smul.addr %s544, 8
      %s546 = scalar_lea.vmem %s5, %s545
      // Predicated region
      $region41: #{decoder_forward.1} parent=39 // pred_check
        %p547 = pneg %p160
      $region42: #{decoder_forward.1} parent=39 // pred_check_branch
        %549 = sbr.rel (%p547) target = $region44
      $region43: #{decoder_forward.1} parent=39 // pred_region
        %s550 = smul.u32 2, %s21
      $region44: #{decoder_forward.1} parent=39 // pred_fallthru
        _
    $region40: #{decoder_forward.1} parent=5 // pred_fallthru
      _
    %p551 = scmp.le.s32.totalorder 2, %s11
    // Predicated region
    $region45: #{decoder_forward.1} parent=5 // pred_check
      %p552 = pneg %p551
    $region46: #{decoder_forward.1} parent=5 // pred_check_branch
      %554 = sbr.rel (%p552) target = $region48
    $region47: #{decoder_forward.1} parent=5 // pred_region
      %s555 = ssub.s32 %s11, 2
      // Predicated region
      $region49: #{decoder_forward.1} parent=47 // pred_check
        %p556 = pneg %p166
      $region50: #{decoder_forward.1} parent=47 // pred_check_branch
        %558 = sbr.rel (%p556) target = $region52
      $region51: #{decoder_forward.1} parent=47 // pred_region
        %s559 = smul.u32 2, %s23
        %p560 = scmp.lt.s32.totalorder %s22, 1
        %s561 = scalar_select %p560, %s22, 1
        %p562 = scmp.lt.s32.totalorder %s559, 1
        %s563 = scalar_select %p562, %s559, 1
        %s564 = smul.addr %s561, 4
        %s565 = sadd.s32 %s563, %s564
        %s566 = smul.addr %s565, 8
        %s567 = scalar_lea.vmem %s5, %s566
      $region52: #{decoder_forward.1} parent=47 // pred_fallthru
        _
    $region48: #{decoder_forward.1} parent=5 // pred_fallthru
      _
  $region6: #{decoder_forward.1} parent=0 // loop_footer
    %s15 = sadd.s32 1, %s11
  $region7: #{decoder_forward.1} parent=0 // loop_footer_branch
    %10 = sbr.rel target = $region3
  $region8: #{decoder_forward.1} parent=0 // loop_exit
    _

</llo_original>
